<compile_context>
chip_gen: v7x
topology: tpu7x:2x2x1
jax: 0.10.0
libtpu: 0.0.40
codegen_flags: <defaults>
</compile_context>

<pallas_src>
import numpy as np
import jax
import jax.numpy as jnp
from jax.experimental import pallas as pl
from jax.experimental.pallas import tpu as pltpu

DIM = 16          # proj_dim (small, consistent with the module)
N_ANGLES = 8
EDGE_PAD = 5


# ----------------------------------------------------------------------------
# Deterministic parameter / operator setup (plain numpy glue, done once)
# ----------------------------------------------------------------------------
def build_edge_pad_mask(image_mask: np.ndarray, pad_size: int = EDGE_PAD) -> np.ndarray:
    """Mirror ReconstructorBase.get_edge_padding_mask (nearest-downscale + pad)."""
    dim = image_mask.shape[0]
    small = dim - pad_size
    # torch 'nearest' interpolate index selection
    idx = np.floor(np.arange(small) * (dim / small)).astype(np.int64)
    scaled = image_mask[np.ix_(idx, idx)]
    pu = pad_size // 2
    pd = pad_size - pu
    padded = np.pad(scaled, ((pu, pd), (pu, pd)))
    edge = np.zeros((dim, dim), dtype=np.float32)
    edge[(padded == 0) & (image_mask == 1)] = 1.0
    return edge


def build_radon_matrix(dim: int, angles: np.ndarray) -> np.ndarray:
    """Pixel-driven parallel-beam Radon forward operator.

    Returns A of shape (n_angles * dim, dim * dim) so that
    sinogram.flatten() = A @ image.flatten().
    """
    c = (dim - 1) / 2.0
    i_idx, j_idx = np.meshgrid(np.arange(dim), np.arange(dim), indexing="ij")
    x = (j_idx - c).astype(np.float64)
    y = (c - i_idx).astype(np.float64)
    pix_flat = (i_idx * dim + j_idx).reshape(-1)
    A = np.zeros((len(angles), dim, dim * dim), dtype=np.float32)
    for ai, th in enumerate(angles):
        t = (x * np.cos(th) + y * np.sin(th) + c).reshape(-1)
        t0 = np.floor(t).astype(np.int64)
        frac = (t - t0).astype(np.float32)
        for tt, ww in ((t0, 1.0 - frac), (t0 + 1, frac)):
            valid = (tt >= 0) & (tt < dim)
            np.add.at(A[ai], (tt[valid], pix_flat[valid]), ww[valid])
    return A.reshape(len(angles) * dim, dim * dim)


# ----------------------------------------------------------------------------
# Fused Pallas kernel: elementwise mask/sigmoid + Radon projection matmul
# ----------------------------------------------------------------------------
def _fused_forward_kernel(w_ref, masks_ref, at_ref, y_ref, s_ref):
    # masks_ref row 0 = m_eff = image_mask*(1-edge),  row 1 = edge (0/1).
    # y = select(edge==1, 1, mask*sigmoid(w)) == m_eff*sigmoid(w) + edge.
    # sigmoid -> EUP, fma -> VPU; everything stays in vregs.
    meff = masks_ref[pl.ds(0, 1), :]
    edge = masks_ref[pl.ds(1, 1), :]
    y = meff * jax.nn.sigmoid(w_ref[...]) + edge
    y_ref[...] = y
    # (1, K) @ (K, P) on the MXU; P = n_angles*dim = 128 is lane-dense,
    # so the sinogram store is a single unmasked vst row.
    s_ref[...] = jnp.dot(y, at_ref[...], preferred_element_type=jnp.float32)


# ----------------------------------------------------------------------------
# Wrapper: NoModel.forward
# ----------------------------------------------------------------------------
def no_model_forward(weights, masks_rows, a_t):
    """weights: (dim, dim); masks_rows: (2, dim*dim) [m_eff; edge];
    a_t: (dim*dim, n_angles*dim)."""
    dim = weights.shape[0]
    k = dim * dim
    p = a_t.shape[1]          # n_angles * dim

    w_row = weights.reshape(1, k)          # one-time lane-dense repack (wrapper side)

    vmem = pl.BlockSpec(memory_space=pltpu.MemorySpace.VMEM)
    y_row, s_row = pl.pallas_call(
        _fused_forward_kernel,
        out_shape=(
            jax.ShapeDtypeStruct((1, k), jnp.float32),
            jax.ShapeDtypeStruct((1, p), jnp.float32),
        ),
        in_specs=[vmem, vmem, vmem],
        out_specs=(vmem, vmem),
    )(w_row, masks_rows, a_t)

    y_hat = y_row.reshape(dim, dim)
    s_hat = s_row.reshape(p // dim, dim)   # (n_angles, proj_dim)
    return y_hat, s_hat


if __name__ == "__main__":
    key = jax.random.PRNGKey(0)

    angles = np.deg2rad(np.linspace(0.0, 180.0, N_ANGLES, endpoint=False))

    # __init__: image_mask defaults to ones; weights initialized from image_mask
    image_mask_np = np.ones((DIM, DIM), dtype=np.float32)
    edge_pad_mask_np = build_edge_pad_mask(image_mask_np, pad_size=EDGE_PAD)
    weights_np = image_mask_np.copy()

    # Static module state precomputed host-side, packed into one lane-dense (2, K) slab.
    meff_np = (image_mask_np * (1.0 - edge_pad_mask_np)).reshape(1, DIM * DIM)
    edge_row_np = edge_pad_mask_np.reshape(1, DIM * DIM)
    masks_np = np.concatenate([meff_np, edge_row_np], axis=0)      # (2, DIM*DIM)

    # Precomputed Radon forward operator, transposed for a lane-dense matmul output.
    # Kept f32 (128 KiB, trivially small); at scale cast to bf16 with f32 accumulation.
    A = build_radon_matrix(DIM, angles)            # (N_ANGLES*DIM, DIM*DIM)
    A_T = jnp.asarray(A.T)                         # (DIM*DIM, N_ANGLES*DIM)

    weights = jnp.asarray(weights_np)
    masks_rows = jnp.asarray(masks_np)

    # Input sinogram `s` is accepted by forward() but unused (as in the PyTorch module)
    s_in = jax.random.normal(key, (N_ANGLES, DIM), dtype=jnp.float32)
    del s_in  # unused by the forward pass

    y_hat, s_hat = no_model_forward(weights, masks_rows, A_T)
    jax.block_until_ready((y_hat, s_hat))

    # sanity: reference check in plain JAX / numpy
    image_mask = jnp.asarray(image_mask_np)
    edge_pad_mask = jnp.asarray(edge_pad_mask_np)
    y_ref = jnp.where(edge_pad_mask == 1.0, 1.0, image_mask * jax.nn.sigmoid(weights))
    s_ref = (A @ np.asarray(y_ref).reshape(-1)).reshape(N_ANGLES, DIM)
    assert np.allclose(np.asarray(y_hat), np.asarray(y_ref), atol=1e-5)
    assert np.allclose(np.asarray(s_hat), s_ref, atol=1e-3)

    print("KERNEL_OK")
</pallas_src>

<mosaic_0001>
module attributes {stable_mosaic.version = 11 : i64} {
  func.func @_fused_forward_kernel(%arg0: memref<1x256xf32, #tpu.memory_space<vmem>>, %arg1: memref<2x256xf32, #tpu.memory_space<vmem>>, %arg2: memref<256x128xf32, #tpu.memory_space<vmem>>, %arg3: memref<1x256xf32, #tpu.memory_space<vmem>>, %arg4: memref<1x128xf32, #tpu.memory_space<vmem>>) attributes {dimension_semantics = [], scalar_prefetch = 0 : i64, scratch_operands = 0 : i64, tpu.core_type = #tpu.core_type<tc>} {
    %c0 = arith.constant 0 : index
    %c0_0 = arith.constant 0 : index
    %0 = vector.load %arg1[%c0, %c0_0] : memref<2x256xf32, #tpu.memory_space<vmem>>, vector<1x256xf32>
    %c1 = arith.constant 1 : index
    %c0_1 = arith.constant 0 : index
    %1 = vector.load %arg1[%c1, %c0_1] : memref<2x256xf32, #tpu.memory_space<vmem>>, vector<1x256xf32>
    %c0_2 = arith.constant 0 : index
    %c0_3 = arith.constant 0 : index
    %2 = vector.load %arg0[%c0_2, %c0_3] : memref<1x256xf32, #tpu.memory_space<vmem>>, vector<1x256xf32>
    %3 = arith.negf %2 : vector<1x256xf32>
    %4 = math.exp %3 : vector<1x256xf32>
    %cst = arith.constant 1.000000e+00 : f32
    %5 = vector.broadcast %cst : f32 to vector<1x256xf32>
    %6 = arith.addf %5, %4 : vector<1x256xf32>
    %7 = arith.divf %5, %6 : vector<1x256xf32>
    %8 = arith.mulf %0, %7 : vector<1x256xf32>
    %9 = arith.addf %8, %1 : vector<1x256xf32>
    %c0_4 = arith.constant 0 : index
    %c0_5 = arith.constant 0 : index
    %10 = vector.load %arg3[%c0_4, %c0_5] : memref<1x256xf32, #tpu.memory_space<vmem>>, vector<1x256xf32>
    tpu.vector_store %arg3[%c0_4, %c0_5], %9 {strides = array<i32>} : memref<1x256xf32, #tpu.memory_space<vmem>>, vector<1x256xf32>,
    %c0_6 = arith.constant 0 : index
    %c0_7 = arith.constant 0 : index
    %11 = vector.load %arg2[%c0_6, %c0_7] : memref<256x128xf32, #tpu.memory_space<vmem>>, vector<256x128xf32>
    %cst_8 = arith.constant dense<0.000000e+00> : vector<1x128xf32>
    %12 = tpu.matmul %9, %11, %cst_8 {dimension_numbers = #tpu.dot_dimension_numbers<[1], [0], [0], [1], [0, 0, 1, 1], [], []>} : vector<1x256xf32>, vector<256x128xf32>, vector<1x128xf32> -> vector<1x128xf32>
    %c0_9 = arith.constant 0 : index
    %c0_10 = arith.constant 0 : index
    %13 = vector.load %arg4[%c0_9, %c0_10] : memref<1x128xf32, #tpu.memory_space<vmem>>, vector<1x128xf32>
    tpu.vector_store %arg4[%c0_9, %c0_10], %12 {strides = array<i32>} : memref<1x128xf32, #tpu.memory_space<vmem>>, vector<1x128xf32>,
    return
  }
}

</mosaic_0001>

<llo_original>
// kernel: tpu_custom_call.1
$region0: #{tpu_custom_call.1}
  #allocation0 [shape = 'u32[]', space=smem, size = 0x4, offset = 0x4, fixed_abs, tag = 'smem constant byte address 0x4 - core index']
  #allocation1 [shape = 'u32[144,128]{1,0:T(1,128)}', space=vmem, size = 0x12000, scoped, tag = 'internal scratch']
  %s0 = inlined_call_operand.hbm [shape: f32[1,256], index: 0, kind: input, shape index: {}]
  %s1 = inlined_call_operand.hbm [shape: f32[2,256], index: 1, kind: input, shape index: {}]
  %s2 = inlined_call_operand.hbm [shape: f32[256,128], index: 2, kind: input, shape index: {}]
  %s3 = inlined_call_operand.hbm [shape: f32[1,256], index: 3, kind: output, shape index: {0}]
  %s4 = inlined_call_operand.hbm [shape: f32[1,128], index: 4, kind: output, shape index: {1}]
  %5 = xla_tuple %s3, %s4
  %s6 = sld [smem:[#allocation0]]
  $region42: #{tpu_custom_call.1} parent=0
    _
  %s8 = ssub.s32 1, %s6
  %s9 = scalar_select 0, %s8, %s6
  $region1: #{tpu_custom_call.1} parent=0
    #allocation2 [shape = 'u8[1024]{0}', space=vmem, size = 0x400, scoped, tag = 'input window, operand 0, single buffered']
    #allocation3 [shape = 's32[1]{0}', space=sflag, size = 0x4, scoped, tag = 'scoped memory for tpu_custom_call.1']
    #allocation4 [shape = 's32[1]{0}', space=sflag, size = 0x4, scoped, tag = 'scoped memory for tpu_custom_call.1']
    #allocation5 [shape = 'u8[2048]{0}', space=vmem, size = 0x800, scoped, tag = 'input window, operand 1, single buffered']
    #allocation6 [shape = 's32[1]{0}', space=sflag, size = 0x4, scoped, tag = 'scoped memory for tpu_custom_call.1']
    #allocation7 [shape = 'u8[131072]{0}', space=vmem, size = 0x20000, scoped, tag = 'input window, operand 2, single buffered']
    #allocation8 [shape = 'u8[1024]{0}', space=vmem, size = 0x400, scoped, tag = 'output window, operand 0, single buffered']
    #allocation9 [shape = 'u8[512]{0}', space=vmem, size = 0x400, scoped, tag = 'output window, operand 1, single buffered']
    #allocation10 [shape = 's32[1]{0}', space=sflag, size = 0x4, scoped, tag = 'scoped memory for tpu_custom_call.1']
    %10 = vsyncpa [#allocation3], 0
    %11 = vsyncpa [#allocation6], 0
    %12 = vsyncpa [#allocation4], 0
    %13 = vsyncpa [#allocation10], 0
    // Predicated region
    $region2: #{tpu_custom_call.1} parent=1 // pred_check
      _
    $region3: #{tpu_custom_call.1} parent=1 // pred_check_branch
      %15 = sbr.rel (0) target = $region5
    $region4: #{tpu_custom_call.1} parent=1 // pred_region
      %s17 = ssub.s32 32, 32
      %18 = vsyncadd [#allocation3], %s17
      %s20 = sshll.u32 [#allocation2], 4
      %s21 = int_to_ptr.vmem [resolvable:$true] %s20
      %23 = dma.hbm_to_vmem [thread:$0]  %s0, 32, %s21, [#allocation3]
    $region5: #{tpu_custom_call.1} parent=1 // pred_fallthru
      _
    // Predicated region
    $region6: #{tpu_custom_call.1} parent=1 // pred_check
      _
    $region7: #{tpu_custom_call.1} parent=1 // pred_check_branch
      %25 = sbr.rel (0) target = $region9
    $region8: #{tpu_custom_call.1} parent=1 // pred_region
      %s27 = ssub.s32 64, 64
      %28 = vsyncadd [#allocation6], %s27
      %s30 = sshll.u32 [#allocation5], 4
      %s31 = int_to_ptr.vmem [resolvable:$true] %s30
      %33 = dma.hbm_to_vmem [thread:$0]  %s1, 64, %s31, [#allocation6]
    $region9: #{tpu_custom_call.1} parent=1 // pred_fallthru
      _
    // Predicated region
    $region10: #{tpu_custom_call.1} parent=1 // pred_check
      _
    $region11: #{tpu_custom_call.1} parent=1 // pred_check_branch
      %35 = sbr.rel (0) target = $region13
    $region12: #{tpu_custom_call.1} parent=1 // pred_region
      %s37 = ssub.s32 4096, 4096
      %38 = vsyncadd [#allocation6], %s37
      %s39 = sshll.u32 [#allocation7], 4
      %s40 = int_to_ptr.vmem [resolvable:$true] %s39
      %45 = dma.hbm_to_vmem [thread:$0]  %s2, 4096, %s40, [#allocation6], 128, 128, 8
    $region13: #{tpu_custom_call.1} parent=1 // pred_fallthru
      _
    // Predicated region
    $region14: #{tpu_custom_call.1} parent=1 // pred_check
      _
    $region15: #{tpu_custom_call.1} parent=1 // pred_check_branch
      %47 = sbr.rel (0) target = $region17
    $region16: #{tpu_custom_call.1} parent=1 // pred_region
      %48 = dma.done [#allocation3], 32
    $region17: #{tpu_custom_call.1} parent=1 // pred_fallthru
      _
    // Predicated region
    $region18: #{tpu_custom_call.1} parent=1 // pred_check
      _
    $region19: #{tpu_custom_call.1} parent=1 // pred_check_branch
      %50 = sbr.rel (0) target = $region21
    $region20: #{tpu_custom_call.1} parent=1 // pred_region
      %51 = dma.done [#allocation6], 64
    $region21: #{tpu_custom_call.1} parent=1 // pred_fallthru
      _
    // Predicated region
    $region22: #{tpu_custom_call.1} parent=1 // pred_check
      _
    $region23: #{tpu_custom_call.1} parent=1 // pred_check_branch
      %53 = sbr.rel (0) target = $region25
    $region24: #{tpu_custom_call.1} parent=1 // pred_region
      %54 = dma.done [#allocation6], 4096
    $region25: #{tpu_custom_call.1} parent=1 // pred_fallthru
      _
    %v55 = vld [vmem:[#allocation5] ss:$2 sm:$0x3]
    %s56 = scalar_lea.vmem [#allocation5], 1
    %v57 = vld [vmem:[%s56] ss:$2 sm:$0x3]
    %v58 = vld [vmem:[#allocation2] sm:$0x3]
    %v59 = vxor.u32 %v58, 2147483648
    %v60 = vmul.f32 %v59, 1.442695
    %v61 = vpow.pop %v60
    %v62 = vadd.f32 %v61, 1.0
    %v63 = vrcp.pop %v62
    %v64 = vmul.f32 1.0, %v63
    %v65 = vmul.f32 %v55, %v64
    %v66 = vadd.f32 %v65, %v57
    %v67 = vlaneseq
    %vm68 = vcmp.ge.s32.totalorder %v67, 0
    %vm69 = vcmp.lt.s32.totalorder %v67, 256
    %vm70 = vmand %vm68, %vm69
    %71 = vst.msk [vmem:[#allocation8] sm:$0x3] %vm70, %v66
    %v72 = vld [vmem:[#allocation7] sm:$0xff]
    %v73 = vld [vmem:[#allocation7 + $0x8] sm:$0xff]
    %v74 = vld [vmem:[#allocation7 + $0x10] sm:$0xff]
    %v75 = vld [vmem:[#allocation7 + $0x18] sm:$0xff]
    %v76 = vld [vmem:[#allocation7 + $0x20] sm:$0xff]
    %v77 = vld [vmem:[#allocation7 + $0x28] sm:$0xff]
    %v78 = vld [vmem:[#allocation7 + $0x30] sm:$0xff]
    %v79 = vld [vmem:[#allocation7 + $0x38] sm:$0xff]
    %v80 = vld [vmem:[#allocation7 + $0x40] sm:$0xff]
    %v81 = vld [vmem:[#allocation7 + $0x48] sm:$0xff]
    %v82 = vld [vmem:[#allocation7 + $0x50] sm:$0xff]
    %v83 = vld [vmem:[#allocation7 + $0x58] sm:$0xff]
    %v84 = vld [vmem:[#allocation7 + $0x60] sm:$0xff]
    %v85 = vld [vmem:[#allocation7 + $0x68] sm:$0xff]
    %v86 = vld [vmem:[#allocation7 + $0x70] sm:$0xff]
    %v87 = vld [vmem:[#allocation7 + $0x78] sm:$0xff]
    %v88 = vld [vmem:[#allocation7 + $0x80] sm:$0xff]
    %v89 = vld [vmem:[#allocation7 + $0x88] sm:$0xff]
    %v90 = vld [vmem:[#allocation7 + $0x90] sm:$0xff]
    %v91 = vld [vmem:[#allocation7 + $0x98] sm:$0xff]
    %v92 = vld [vmem:[#allocation7 + $0xa0] sm:$0xff]
    %v93 = vld [vmem:[#allocation7 + $0xa8] sm:$0xff]
    %v94 = vld [vmem:[#allocation7 + $0xb0] sm:$0xff]
    %v95 = vld [vmem:[#allocation7 + $0xb8] sm:$0xff]
    %v96 = vld [vmem:[#allocation7 + $0xc0] sm:$0xff]
    %v97 = vld [vmem:[#allocation7 + $0xc8] sm:$0xff]
    %v98 = vld [vmem:[#allocation7 + $0xd0] sm:$0xff]
    %v99 = vld [vmem:[#allocation7 + $0xd8] sm:$0xff]
    %v100 = vld [vmem:[#allocation7 + $0xe0] sm:$0xff]
    %v101 = vld [vmem:[#allocation7 + $0xe8] sm:$0xff]
    %v102 = vld [vmem:[#allocation7 + $0xf0] sm:$0xff]
    %v103 = vld [vmem:[#allocation7 + $0xf8] sm:$0xff]
    %v105 = vlaneseq
    %v106 = vshrl.u32 %v105, 7
    %v107 = vsub.s32 0, %v106
    %v108 = vrot.slane %v66, %v107
    %v109 = vlaneseq
    %v110 = vshrl.u32 %v109, 7
    %v111 = vsub.s32 1, %v110
    %v112 = vrot.slane %v66, %v111
    %115 = vmatprep.subr.mxu0 0.0
    %116 = vmatpush1.msra.mxu0 %v72
    %117 = vmatprep.subr.mxu0 0.0
    %118 = vmatpush1.msra.mxu0 %v73
    %119 = vmatprep.subr.mxu0 0.0
    %120 = vmatpush1.msra.mxu0 %v74
    %121 = vmatprep.subr.mxu0 0.0
    %122 = vmatpush1.msra.mxu0 %v75
    %123 = vmatprep.subr.mxu0 0.0
    %124 = vmatpush1.msra.mxu0 %v76
    %125 = vmatprep.subr.mxu0 0.0
    %126 = vmatpush1.msra.mxu0 %v77
    %127 = vmatprep.subr.mxu0 0.0
    %128 = vmatpush1.msra.mxu0 %v78
    %129 = vmatprep.subr.mxu0 0.0
    %130 = vmatpush1.msra.mxu0 %v79
    %131 = vmatprep.subr.mxu0 0.0
    %132 = vmatpush1.msra.mxu0 %v80
    %133 = vmatprep.subr.mxu0 0.0
    %134 = vmatpush1.msra.mxu0 %v81
    %135 = vmatprep.subr.mxu0 0.0
    %136 = vmatpush1.msra.mxu0 %v82
    %137 = vmatprep.subr.mxu0 0.0
    %138 = vmatpush1.msra.mxu0 %v83
    %139 = vmatprep.subr.mxu0 0.0
    %140 = vmatpush1.msra.mxu0 %v84
    %141 = vmatprep.subr.mxu0 0.0
    %142 = vmatpush1.msra.mxu0 %v85
    %143 = vmatprep.subr.mxu0 0.0
    %144 = vmatpush1.msra.mxu0 %v86
    %145 = vmatprep.subr.mxu0 0.0
    %146 = vmatpush1.msra.mxu0 %v87
    %147 = vmatprep.subr.mxu0 0.0
    %148 = vmatpush1.msra.mxu0 %v88
    %149 = vmatprep.subr.mxu0 0.0
    %150 = vmatpush1.msra.mxu0 %v89
    %151 = vmatprep.subr.mxu0 0.0
    %152 = vmatpush1.msra.mxu0 %v90
    %153 = vmatprep.subr.mxu0 0.0
    %154 = vmatpush1.msra.mxu0 %v91
    %155 = vmatprep.subr.mxu0 0.0
    %156 = vmatpush1.msra.mxu0 %v92
    %157 = vmatprep.subr.mxu0 0.0
    %158 = vmatpush1.msra.mxu0 %v93
    %159 = vmatprep.subr.mxu0 0.0
    %160 = vmatpush1.msra.mxu0 %v94
    %161 = vmatprep.subr.mxu0 0.0
    %162 = vmatpush1.msra.mxu0 %v95
    %163 = vmatprep.subr.mxu0 0.0
    %164 = vmatpush1.msra.mxu0 %v96
    %165 = vmatprep.subr.mxu0 0.0
    %166 = vmatpush1.msra.mxu0 %v97
    %167 = vmatprep.subr.mxu0 0.0
    %168 = vmatpush1.msra.mxu0 %v98
    %169 = vmatprep.subr.mxu0 0.0
    %170 = vmatpush1.msra.mxu0 %v99
    %171 = vmatprep.subr.mxu0 0.0
    %172 = vmatpush1.msra.mxu0 %v100
    %173 = vmatprep.subr.mxu0 0.0
    %174 = vmatpush1.msra.mxu0 %v101
    %175 = vmatprep.subr.mxu0 0.0
    %176 = vmatpush1.msra.mxu0 %v102
    %177 = vmatprep.subr.mxu0 0.0
    %178 = vmatpush1.msra.mxu0 %v103
    %179 = vmatprep.mubr.f32.mxu0 %v112
    %180 = vmatmul.mubr.f32.gmra.mrb[0].mxu0 %v108
    %v181 = vpop.f32.mrb[0].mxu0
    %v182 = vadd.f32 0.0, %v181
    %v183 = vpop.f32.mrb[0].mxu0
    %184 = vdwg.mxu0
    %185 = vst [vmem:[#allocation9] sm:$0x1] %v182
    // Predicated region
    $region26: #{tpu_custom_call.1} parent=1 // pred_check
      _
    $region27: #{tpu_custom_call.1} parent=1 // pred_check_branch
      %187 = sbr.rel (0) target = $region29
    $region28: #{tpu_custom_call.1} parent=1 // pred_region
      %s189 = ssub.s32 32, 32
      %190 = vsyncadd [#allocation4], %s189
      %s192 = sshll.u32 [#allocation8], 4
      %s193 = int_to_ptr.vmem [resolvable:$true] %s192
      %195 = dma.vmem_to_hbm [thread:$0]  %s193, 32, %s3, [#allocation4]
    $region29: #{tpu_custom_call.1} parent=1 // pred_fallthru
      _
    // Predicated region
    $region30: #{tpu_custom_call.1} parent=1 // pred_check
      _
    $region31: #{tpu_custom_call.1} parent=1 // pred_check_branch
      %197 = sbr.rel (0) target = $region33
    $region32: #{tpu_custom_call.1} parent=1 // pred_region
      %s199 = ssub.s32 16, 16
      %200 = vsyncadd [#allocation10], %s199
      %s202 = sshll.u32 [#allocation9], 4
      %s203 = int_to_ptr.vmem [resolvable:$true] %s202
      %205 = dma.vmem_to_hbm [thread:$0]  %s203, 16, %s4, [#allocation10]
    $region33: #{tpu_custom_call.1} parent=1 // pred_fallthru
      _
    // Predicated region
    $region34: #{tpu_custom_call.1} parent=1 // pred_check
      _
    $region35: #{tpu_custom_call.1} parent=1 // pred_check_branch
      %207 = sbr.rel (0) target = $region37
    $region36: #{tpu_custom_call.1} parent=1 // pred_region
      %208 = dma.done [#allocation4], 32
    $region37: #{tpu_custom_call.1} parent=1 // pred_fallthru
      _
    // Predicated region
    $region38: #{tpu_custom_call.1} parent=1 // pred_check
      _
    $region39: #{tpu_custom_call.1} parent=1 // pred_check_branch
      %210 = sbr.rel (0) target = $region41
    $region40: #{tpu_custom_call.1} parent=1 // pred_region
      %211 = dma.done [#allocation10], 16
    $region41: #{tpu_custom_call.1} parent=1 // pred_fallthru
      _
    %212 = vsyncpa [#allocation3], 1
    %213 = vsyncpa [#allocation6], 1
    %214 = vsyncpa [#allocation4], 1
    %215 = vsyncpa [#allocation10], 1

</llo_original>
